<compile_context>
chip_gen: v7x
topology: tpu7x:2x2x1
jax: 0.10.0
libtpu: 0.0.40
codegen_flags: <defaults>
</compile_context>

<pallas_src>
import functools

import jax
import jax.numpy as jnp
from jax.experimental import pallas as pl
from jax.experimental.pallas import tpu as pltpu


def _round_up(x, m):
    return ((x + m - 1) // m) * m


def _cdiv(a, b):
    return -(-a // b)


def _branched_l2_kernel(out_ref, tgt_ref, ctrl_ref, loss_ref, *,
                        rows_total, check_rows):
    # out_ref : (3, rb, L) VMEM (input dtype)
    # tgt_ref : (rb, L)    VMEM (input dtype)
    # ctrl_ref: (rb, L)    VMEM int8 per-element branch id (<0 or >2 => no branch)
    # loss_ref: (1, 1)     SMEM f32 -- this block's partial sum
    tgt = tgt_ref[...].astype(jnp.float32)            # (rb, L)
    ctrl = ctrl_ref[...].astype(jnp.int32)            # (rb, L)
    rb, L = tgt.shape

    total = jnp.zeros((rb, L), jnp.float32)
    for i in range(3):                                # unrolled over the 3 branches
        d = out_ref[i].astype(jnp.float32) - tgt      # (rb, L)
        m = (ctrl == i).astype(jnp.float32)           # PyTorch-style 0/1 mask multiply
        total = total + d * d * m

    if check_rows:
        # The last grid block may extend past the real row count; its out-of-range
        # rows hold undefined VMEM data, so drop them with a select (a select also
        # discards NaN/Inf garbage, unlike a multiply).
        row = (jax.lax.broadcasted_iota(jnp.int32, (rb, L), 0)
               + pl.program_id(0) * rb)
        total = jnp.where(row < rows_total, total, 0.0)

    loss_ref[0, 0] = jnp.sum(total)


def branched_l2_loss(output, target, controls, *, block_elems: int = 256 * 1024):
    """output: (3, B, T), target: (B, T), controls: (B,) int -> scalar f32 loss."""
    nb, B, T = output.shape
    assert nb == 3, "BranchedL2Loss expects exactly 3 branches"
    N = B * T

    # Per-element branch id as int8 (controls repeated over the T targets).
    # NOTE: branch ids are tiny (0..2); int8 is plenty and quarters the HBM stream.
    # TODO(synk): the int8 repeat still costs ~2 bytes/element of HBM traffic; an
    # in-kernel lane interleave of the (B,)-shaped stream would remove it, but
    # Mosaic has no cheap cross-lane expand primitive for that.
    ctrl_elem = jnp.repeat(controls.reshape(-1).astype(jnp.int8), T)

    out2 = output.reshape(nb, N)
    tgt2 = target.reshape(N)

    # Pick a lane width L that divides N so the (R, L) re-layout is a free reshape.
    L = 0
    for cand in (512, 256, 128):
        if N % cand == 0:
            L = cand
            break
    if L == 0:
        # Ragged N (< multiple of 128): pad fallback.  This materializes padded
        # copies, but only triggers for awkward sizes; padded out/tgt are zeros so
        # they contribute nothing regardless of the control value.
        L = 128
        n_pad = _round_up(N, L)
        pad = n_pad - N
        out2 = jnp.pad(out2, ((0, 0), (0, pad)))
        tgt2 = jnp.pad(tgt2, ((0, pad),))
        ctrl_elem = jnp.pad(ctrl_elem, ((0, pad),), constant_values=-1)
        n_eff = n_pad
    else:
        n_eff = N

    R = n_eff // L
    out3 = out2.reshape(nb, R, L)
    tgt3 = tgt2.reshape(R, L)
    ctrl3 = ctrl_elem.reshape(R, L)

    # Row-block size: ~block_elems flattened elements per grid step (amortizes the
    # per-step pipeline overhead), a multiple of 32 (int8 sublane tile), capped so
    # there are ~4+ blocks for v7x's two TensorCores when N is large.
    desired_rb = max(32, (block_elems // L) // 32 * 32)
    rb = min(desired_rb, _round_up(_cdiv(R, 4), 32))
    if rb >= R:
        rb = R                      # single full-extent block (exempt from tiling rule)
    n_blocks = _cdiv(R, rb)
    check_rows = (R % rb) != 0

    kernel = functools.partial(_branched_l2_kernel,
                               rows_total=R, check_rows=check_rows)

    bytes_accessed = (out3.size * out3.dtype.itemsize
                      + tgt3.size * tgt3.dtype.itemsize
                      + ctrl3.size * ctrl3.dtype.itemsize
                      + 4 * n_blocks)

    partials = pl.pallas_call(
        kernel,
        out_shape=jax.ShapeDtypeStruct((n_blocks, 1), jnp.float32),
        grid=(n_blocks,),
        in_specs=[
            pl.BlockSpec((nb, rb, L), lambda b: (0, b, 0)),   # stacked branch outputs
            pl.BlockSpec((rb, L), lambda b: (b, 0)),          # target
            pl.BlockSpec((rb, L), lambda b: (b, 0)),          # per-element branch id
        ],
        out_specs=pl.BlockSpec((1, 1), lambda b: (b, 0),
                               memory_space=pltpu.MemorySpace.SMEM),
        compiler_params=pltpu.CompilerParams(
            dimension_semantics=("parallel",),               # independent blocks (v7x 2 TCs)
            vmem_limit_bytes=32 * 1024 * 1024,               # safe on v5e/v6e/v7x
        ),
        cost_estimate=pl.CostEstimate(flops=8 * N, transcendentals=0,
                                      bytes_accessed=int(bytes_accessed)),
    )(out3, tgt3, ctrl3)

    # Tiny final reduction + normalization (divide by batch size, like the module's
    # output[0].shape[0]) in plain JAX.
    return jnp.sum(partials) / jnp.float32(B)


def _reference_loss(output, target, controls):
    """Pure-JAX reference mirroring the PyTorch module."""
    B = output.shape[1]
    total = jnp.float32(0.0)
    for i in range(3):
        m = (controls.reshape(-1) == i).astype(jnp.float32)[:, None]
        total = total + jnp.sum((output[i].astype(jnp.float32)
                                 - target.astype(jnp.float32)) ** 2 * m)
    return total / jnp.float32(B)


if __name__ == "__main__":
    key = jax.random.PRNGKey(0)
    k1, k2, k3, k4, k5, k6 = jax.random.split(key, 6)

    # --- Check 1: the module's natural small shape (batch=8, num_targets=2) -----
    # Exercises the pad-fallback path (N = 16 not a multiple of 128).
    B, T = 8, 2
    output = jax.random.normal(k1, (3, B, T), dtype=jnp.float32)
    target = jax.random.normal(k2, (B, T), dtype=jnp.float32)
    controls = jax.random.randint(k3, (B,), 0, 3, dtype=jnp.int32)

    loss = branched_l2_loss(output, target, controls)
    jax.block_until_ready(loss)
    ref = _reference_loss(output, target, controls)
    assert jnp.allclose(loss, ref, rtol=1e-5, atol=1e-5), (loss, ref)

    # --- Check 2: dense layout, multi-block grid with a ragged last block, and ---
    # out-of-range control values (match no branch -> contribute nothing).
    B2, T2 = 2112, 2               # N = 4224 = 33 rows x 128 lanes
    output2 = jax.random.normal(k4, (3, B2, T2), dtype=jnp.float32)
    target2 = jax.random.normal(k5, (B2, T2), dtype=jnp.float32)
    controls2 = jax.random.randint(k6, (B2,), 0, 4, dtype=jnp.int32)

    loss2 = branched_l2_loss(output2, target2, controls2, block_elems=2048)
    jax.block_until_ready(loss2)
    ref2 = _reference_loss(output2, target2, controls2)
    assert jnp.allclose(loss2, ref2, rtol=1e-4, atol=1e-4), (loss2, ref2)

    print("KERNEL_OK")
</pallas_src>

<mosaic_0001>
module attributes {stable_mosaic.version = 11 : i64} {
  func.func @_branched_l2_kernel(%arg0: i32, %arg1: memref<3x1x128xf32, #tpu.memory_space<vmem>>, %arg2: memref<1x128xf32, #tpu.memory_space<vmem>>, %arg3: memref<1x128xi8, #tpu.memory_space<vmem>>, %arg4: memref<1x1xf32, #tpu.memory_space<smem>>) attributes {dimension_semantics = [#tpu.dimension_semantics<parallel>], iteration_bounds = array<i64: 1>, scalar_prefetch = 0 : i64, scratch_operands = 0 : i64, tpu.core_type = #tpu.core_type<tc>, window_params = [{transform_indices = @transform_0, window_bounds = array<i64: 3, 1, 128>}, {transform_indices = @transform_1, window_bounds = array<i64: 1, 128>}, {transform_indices = @transform_2, window_bounds = array<i64: 1, 128>}, {transform_indices = @transform_3, window_bounds = array<i64: 1, 1>}]} {
    %c0 = arith.constant 0 : index
    %c0_0 = arith.constant 0 : index
    %0 = vector.load %arg2[%c0, %c0_0] : memref<1x128xf32, #tpu.memory_space<vmem>>, vector<1x128xf32>
    %c0_1 = arith.constant 0 : index
    %c0_2 = arith.constant 0 : index
    %1 = vector.load %arg3[%c0_1, %c0_2] : memref<1x128xi8, #tpu.memory_space<vmem>>, vector<1x128xi8>
    %2 = arith.extsi %1 : vector<1x128xi8> to vector<1x128xi32>
    %cst = arith.constant 0.000000e+00 : f32
    %3 = vector.broadcast %cst : f32 to vector<1x128xf32>
    %c0_3 = arith.constant 0 : index
    %c0_4 = arith.constant 0 : index
    %c0_5 = arith.constant 0 : index
    %4 = vector.load %arg1[%c0_3, %c0_4, %c0_5] : memref<3x1x128xf32, #tpu.memory_space<vmem>>, vector<1x1x128xf32>
    %5 = vector.shape_cast %4 : vector<1x1x128xf32> to vector<1x128xf32>
    %6 = arith.subf %5, %0 : vector<1x128xf32>
    %c0_i32 = arith.constant 0 : i32
    %7 = vector.broadcast %c0_i32 : i32 to vector<1x128xi32>
    %8 = arith.cmpi eq, %2, %7 : vector<1x128xi32>
    %9 = arith.extui %8 : vector<1x128xi1> to vector<1x128xi32>
    %10 = arith.sitofp %9 : vector<1x128xi32> to vector<1x128xf32>
    %11 = arith.mulf %6, %6 : vector<1x128xf32>
    %12 = arith.mulf %11, %10 : vector<1x128xf32>
    %13 = arith.addf %3, %12 : vector<1x128xf32>
    %c1 = arith.constant 1 : index
    %c0_6 = arith.constant 0 : index
    %c0_7 = arith.constant 0 : index
    %14 = vector.load %arg1[%c1, %c0_6, %c0_7] : memref<3x1x128xf32, #tpu.memory_space<vmem>>, vector<1x1x128xf32>
    %15 = vector.shape_cast %14 : vector<1x1x128xf32> to vector<1x128xf32>
    %16 = arith.subf %15, %0 : vector<1x128xf32>
    %c1_i32 = arith.constant 1 : i32
    %17 = vector.broadcast %c1_i32 : i32 to vector<1x128xi32>
    %18 = arith.cmpi eq, %2, %17 : vector<1x128xi32>
    %19 = arith.extui %18 : vector<1x128xi1> to vector<1x128xi32>
    %20 = arith.sitofp %19 : vector<1x128xi32> to vector<1x128xf32>
    %21 = arith.mulf %16, %16 : vector<1x128xf32>
    %22 = arith.mulf %21, %20 : vector<1x128xf32>
    %23 = arith.addf %13, %22 : vector<1x128xf32>
    %c2 = arith.constant 2 : index
    %c0_8 = arith.constant 0 : index
    %c0_9 = arith.constant 0 : index
    %24 = vector.load %arg1[%c2, %c0_8, %c0_9] : memref<3x1x128xf32, #tpu.memory_space<vmem>>, vector<1x1x128xf32>
    %25 = vector.shape_cast %24 : vector<1x1x128xf32> to vector<1x128xf32>
    %26 = arith.subf %25, %0 : vector<1x128xf32>
    %c2_i32 = arith.constant 2 : i32
    %27 = vector.broadcast %c2_i32 : i32 to vector<1x128xi32>
    %28 = arith.cmpi eq, %2, %27 : vector<1x128xi32>
    %29 = arith.extui %28 : vector<1x128xi1> to vector<1x128xi32>
    %30 = arith.sitofp %29 : vector<1x128xi32> to vector<1x128xf32>
    %31 = arith.mulf %26, %26 : vector<1x128xf32>
    %32 = arith.mulf %31, %30 : vector<1x128xf32>
    %33 = arith.addf %23, %32 : vector<1x128xf32>
    %34 = vector.shape_cast %33 : vector<1x128xf32> to vector<1x1x128xf32>
    %cst_10 = arith.constant dense<0.000000e+00> : vector<1xf32>
    %35 = vector.multi_reduction <add>, %34, %cst_10 [1, 2] : vector<1x1x128xf32> to vector<1xf32>
    %36 = vector.shape_cast %35 : vector<1xf32> to vector<1x1x1xf32>
    %37 = vector.extract %36[0, 0, 0] : f32 from vector<1x1x1xf32>
    %c0_11 = arith.constant 0 : index
    %c0_12 = arith.constant 0 : index
    %38 = memref.load %arg4[%c0_11, %c0_12] : memref<1x1xf32, #tpu.memory_space<smem>>
    memref.store %37, %arg4[%c0_11, %c0_12] : memref<1x1xf32, #tpu.memory_space<smem>>
    return
  }
  func.func @transform_0(%arg0: i32) -> (i32, i32, i32) {
    %c0_i32 = arith.constant 0 : i32
    %c0_i32_0 = arith.constant 0 : i32
    %c0_i32_1 = arith.constant 0 : i32
    return %c0_i32, %arg0, %c0_i32_0 : i32, i32, i32
  }
  func.func @transform_1(%arg0: i32) -> (i32, i32) {
    %c0_i32 = arith.constant 0 : i32
    %c0_i32_0 = arith.constant 0 : i32
    return %arg0, %c0_i32 : i32, i32
  }
  func.func @transform_2(%arg0: i32) -> (i32, i32) {
    %c0_i32 = arith.constant 0 : i32
    %c0_i32_0 = arith.constant 0 : i32
    return %arg0, %c0_i32 : i32, i32
  }
  func.func @transform_3(%arg0: i32) -> (i32, i32) {
    %c0_i32 = arith.constant 0 : i32
    %c0_i32_0 = arith.constant 0 : i32
    return %arg0, %c0_i32 : i32, i32
  }
}

</mosaic_0001>

<llo_original>
// kernel: tpu_custom_call.1
$region0: #{tpu_custom_call.1}
  #allocation0 [shape = 'u32[]', space=smem, size = 0x4, offset = 0x4, fixed_abs, tag = 'smem constant byte address 0x4 - core index']
  #allocation1 [shape = 'u32[144,128]{1,0:T(1,128)}', space=vmem, size = 0x12000, scoped, tag = 'internal scratch']
  %s0 = inlined_call_operand.hbm [shape: f32[3,1,128], index: 0, kind: input, shape index: {}]
  %s1 = inlined_call_operand.vmem [shape: f32[1,128], index: 1, kind: input, shape index: {}]
  %s2 = inlined_call_operand.vmem [shape: s8[1,128], index: 2, kind: input, shape index: {}]
  %s3 = inlined_call_operand.hbm [shape: f32[1,1], index: 3, kind: output, shape index: {}]
  %s4 = sld [smem:[#allocation0]]
  $region26: #{tpu_custom_call.1} parent=0
    _
  %s6 = ssub.s32 1, %s4
  %s7 = scalar_select 0, %s6, %s4
  $region1: #{tpu_custom_call.1} parent=0
    #allocation2 [shape = 'u8[1536]{0}', space=vmem, size = 0x800, scoped, tag = 'input window, operand 0, single buffered']
    #allocation3 [shape = 's32[1]{0}', space=sflag, size = 0x4, scoped, tag = 'scoped memory for tpu_custom_call.1']
    #allocation4 [shape = 's32[1]{0}', space=sflag, size = 0x4, scoped, tag = 'scoped memory for tpu_custom_call.1']
    #allocation5 [shape = 'u8[512]{0}', space=smem, size = 0x200, scoped, tag = 'output window, operand 0, single buffered']
    %8 = vsyncpa [#allocation3], 0
    %9 = vsyncpa [#allocation4], 0
    // Predicated region
    $region2: #{tpu_custom_call.1} parent=1 // pred_check
      _
    $region3: #{tpu_custom_call.1} parent=1 // pred_check_branch
      %11 = sbr.rel (0) target = $region5
    $region4: #{tpu_custom_call.1} parent=1 // pred_region
      %s13 = ssub.s32 48, 48
      %14 = vsyncadd [#allocation3], %s13
      %s15 = sshll.u32 [#allocation2], 4
      %s16 = int_to_ptr.vmem [resolvable:$true] %s15
      %21 = dma.hbm_to_vmem [thread:$0]  %s0, 48, %s16, [#allocation3], 16, 16, 1
    $region5: #{tpu_custom_call.1} parent=1 // pred_fallthru
      _
    // Predicated region
    $region6: #{tpu_custom_call.1} parent=1 // pred_check
      _
    $region7: #{tpu_custom_call.1} parent=1 // pred_check_branch
      %23 = sbr.rel (0) target = $region9
    $region8: #{tpu_custom_call.1} parent=1 // pred_region
      _
    $region9: #{tpu_custom_call.1} parent=1 // pred_fallthru
      _
    // Predicated region
    $region10: #{tpu_custom_call.1} parent=1 // pred_check
      _
    $region11: #{tpu_custom_call.1} parent=1 // pred_check_branch
      %25 = sbr.rel (0) target = $region13
    $region12: #{tpu_custom_call.1} parent=1 // pred_region
      _
    $region13: #{tpu_custom_call.1} parent=1 // pred_fallthru
      _
    // Predicated region
    $region14: #{tpu_custom_call.1} parent=1 // pred_check
      _
    $region15: #{tpu_custom_call.1} parent=1 // pred_check_branch
      %27 = sbr.rel (0) target = $region17
    $region16: #{tpu_custom_call.1} parent=1 // pred_region
      %28 = dma.done [#allocation3], 48
    $region17: #{tpu_custom_call.1} parent=1 // pred_fallthru
      _
    %v29 = vld [vmem:[%s1] sm:$0x1]
    %v30 = vld [vmem:[%s2] sm:$0x1]
    %v31 = vunpack.c.0.s8 %v30
    %v32 = vld [vmem:[#allocation2] sm:$0x1]
    %v33 = vsub.f32 %v32, %v29
    %vm34 = vcmp.eq.s32.totalorder %v31, 0
    %v35 = vsel %vm34, 1, 0
    %v36 = vcvt.s32.f32 %v35
    %v37 = vmul.f32 %v33, %v33
    %v38 = vmul.f32 %v37, %v36
    %v39 = vadd.f32 %v38, 0.0
    %s40 = scalar_lea.vmem [#allocation2], 1
    %v41 = vld [vmem:[%s40] sm:$0x1]
    %v42 = vsub.f32 %v41, %v29
    %vm43 = vcmp.eq.s32.totalorder %v31, 1
    %v44 = vsel %vm43, 1, 0
    %v45 = vcvt.s32.f32 %v44
    %v46 = vmul.f32 %v42, %v42
    %v47 = vmul.f32 %v46, %v45
    %v48 = vadd.f32 %v39, %v47
    %s49 = scalar_lea.vmem [#allocation2], 2
    %v50 = vld [vmem:[%s49] sm:$0x1]
    %v51 = vsub.f32 %v50, %v29
    %vm52 = vcmp.eq.s32.totalorder %v31, 2
    %v53 = vsel %vm52, 1, 0
    %v54 = vcvt.s32.f32 %v53
    %v55 = vmul.f32 %v51, %v51
    %v56 = vmul.f32 %v55, %v54
    %v57 = vadd.f32 %v48, %v56
    %vm58 = vcmask 1040384
    %v59 = vsel %vm58, %v57, 0.0
    %60 = vadd.xlane.f32.xlu0 %v59
    %v61 = vpop.xlane.xlu0 %60
    %v62 = vrot.slane %v61, 4
    %v63 = vadd.f32 %v61, %v62
    %v64 = vrot.slane %v63, 2
    %v65 = vadd.f32 %v63, %v64
    %v66 = vrot.slane %v65, 1
    %v67 = vadd.f32 %v65, %v66
    %s68 = vtos %v67
    %s69 = scalar_lea.smem [#allocation5], 0
    %70 = sst [smem:[%s69]] %s68
    // Predicated region
    $region18: #{tpu_custom_call.1} parent=1 // pred_check
      _
    $region19: #{tpu_custom_call.1} parent=1 // pred_check_branch
      %72 = sbr.rel (0) target = $region21
    $region20: #{tpu_custom_call.1} parent=1 // pred_region
      %s74 = ssub.s32 16, 16
      %75 = vsyncadd [#allocation4], %s74
      %78 = dma.smem_to_hbm [#allocation5], 16, %s3, [#allocation4]
    $region21: #{tpu_custom_call.1} parent=1 // pred_fallthru
      _
    // Predicated region
    $region22: #{tpu_custom_call.1} parent=1 // pred_check
      _
    $region23: #{tpu_custom_call.1} parent=1 // pred_check_branch
      %80 = sbr.rel (0) target = $region25
    $region24: #{tpu_custom_call.1} parent=1 // pred_region
      %81 = dma.done [#allocation4], 16
    $region25: #{tpu_custom_call.1} parent=1 // pred_fallthru
      _
    %82 = sfence
    %83 = vsyncpa [#allocation3], 1
    %84 = vsyncpa [#allocation4], 1

</llo_original>
